<compile_context>
chip_gen: v5e
topology: v5e:2x2
jax: 0.10.0
libtpu: 0.0.40
codegen_flags: <defaults>
</compile_context>

<pallas_src>
import jax
import jax.numpy as jnp
from jax.experimental import pallas as pl
from jax.experimental.pallas import tpu as pltpu

D_IN, D_H, D_OUT = 12 * 4, 128, 1

# Packed parameter slab layout, f32, shape (128, 256):
#   [:, 0:48]    fc1.weight          (out=128, in=48)
#   [:, 48]      fc1.bias            (128,)
#   [:, 49]      fc2.bias            (128,)
#   [:, 50]      mu.weight[0, :]     (128,)  (column -> sublane reduce; D_OUT == 1)
#   [:, 51]      mu.bias broadcast   (128,)
#   [:, 128:256] fc2.weight          (out=128, in=128)
_P_COLS = 256

# Batch tile (lane dim of the intermediates / output). Multiple of 256 keeps the
# v6e/v7x 256-wide MXU full; VMEM per step is < 1 MB so this fits all generations.
_MAX_TB = 512

# bf16 MXU operands + f32 accumulation (per perf review). jnp.float32 restores
# bit-closer parity with the PyTorch module at ~3x matmul cost on v6e/v7x.
MXU_DTYPE = jnp.bfloat16


def actor_kernel(x_ref, p_ref, oT_ref):
    x = x_ref[...]                                # (TB, 48)  natural batch-major
    w1 = p_ref[:, 0:D_IN]                         # (128, 48)
    b1 = p_ref[:, D_IN:D_IN + 1]                  # (128, 1)
    b2 = p_ref[:, D_IN + 1:D_IN + 2]              # (128, 1)
    w3 = p_ref[:, D_IN + 2:D_IN + 3]              # (128, 1)
    b3 = p_ref[0:1, D_IN + 3:D_IN + 4]            # (1, 1)
    w2 = p_ref[:, 128:256]                        # (128, 128)

    # Feature-major flip is an in-VMEM (XLU) transpose — no HBM traffic.
    xT = x.T                                      # (48, TB) f32

    # fc1 / fc2 on the MXU in bf16, f32 accumulation; bias + ReLU stay f32 (VPU).
    h1 = jnp.dot(w1.astype(MXU_DTYPE), xT.astype(MXU_DTYPE),
                 preferred_element_type=jnp.float32)            # (128, TB)
    h1 = jnp.maximum(h1 + b1, 0.0)

    h2 = jnp.dot(w2.astype(MXU_DTYPE), h1.astype(MXU_DTYPE),
                 preferred_element_type=jnp.float32)            # (128, TB)
    h2 = jnp.maximum(h2 + b2, 0.0)

    # mu layer as a VPU multiply + sublane reduce -> lane-dense (1, TB) slab.
    # TODO(synk): fold into an MXU dot if the VALU slot binds after the bf16 switch.
    z = jnp.sum(h2 * w3, axis=0, keepdims=True) + b3            # (1, TB) f32
    oT_ref[...] = jnp.tanh(z)


@jax.jit
def actor_forward(state, packed_params):
    """state: (B, 48) float32; packed_params: (128, 256) float32 slab."""
    B = state.shape[0]
    # Exact-fit single block for small B (blocks == full array dims, so no (8,128)
    # alignment requirement); 512-wide streamed blocks for large B (ragged last
    # block handled by Pallas, stale tail columns never written back).
    TB = B if B <= _MAX_TB else _MAX_TB
    grid = (pl.cdiv(B, TB),)

    outT = pl.pallas_call(
        actor_kernel,
        out_shape=jax.ShapeDtypeStruct((1, B), jnp.float32),
        grid_spec=pltpu.PrefetchScalarGridSpec(
            num_scalar_prefetch=0,
            grid=grid,
            in_specs=[
                # Activations: natural layout, streamed / double-buffered over batch.
                pl.BlockSpec((TB, D_IN), lambda i: (i, 0)),
                # Packed parameters: constant index map -> fetched once, resident.
                pl.BlockSpec((D_H, _P_COLS), lambda i: (0, 0)),
            ],
            # Lane-dense (1, TB) output slab.
            out_specs=pl.BlockSpec((1, TB), lambda i: (0, i)),
        ),
        compiler_params=pltpu.CompilerParams(
            dimension_semantics=("parallel",),
        ),
    )(state.astype(jnp.float32), packed_params)

    return outT.reshape(B, 1)


def init_params(key):
    """Deterministic init mirroring the PyTorch module (weight = (out, in))."""
    k = jax.random.split(key, 6)
    s1 = 1.0 / jnp.sqrt(D_IN)
    s2 = 1.0 / jnp.sqrt(D_H)
    return {
        "fc1_w": jax.random.uniform(k[0], (D_H, D_IN), jnp.float32, -s1, s1),
        "fc1_b": jax.random.uniform(k[1], (D_H,), jnp.float32, -s1, s1),
        "fc2_w": jax.random.uniform(k[2], (D_H, D_H), jnp.float32, -s2, s2),
        "fc2_b": jax.random.uniform(k[3], (D_H,), jnp.float32, -s2, s2),
        "mu_w": jax.random.uniform(k[4], (D_OUT, D_H), jnp.float32, -s2, s2),
        "mu_b": jax.random.uniform(k[5], (D_OUT,), jnp.float32, -s2, s2),
    }


def pack_params(p):
    """Pack all six tensors into one (128, 256) f32 VMEM slab (single DMA)."""
    P = jnp.zeros((D_H, _P_COLS), jnp.float32)
    P = P.at[:, 0:D_IN].set(p["fc1_w"])
    P = P.at[:, D_IN].set(p["fc1_b"])
    P = P.at[:, D_IN + 1].set(p["fc2_b"])
    # NOTE: the two lines below rely on D_OUT == 1 (single mu output column).
    P = P.at[:, D_IN + 2].set(p["mu_w"][0, :])
    P = P.at[:, D_IN + 3].set(jnp.full((D_H,), p["mu_b"][0], jnp.float32))
    P = P.at[:, 128:256].set(p["fc2_w"])
    return P


def actor_ref(state, p):
    """Pure-JAX f32 reference (same math as the PyTorch forward)."""
    h1 = jnp.maximum(state @ p["fc1_w"].T + p["fc1_b"], 0.0)
    h2 = jnp.maximum(h1 @ p["fc2_w"].T + p["fc2_b"], 0.0)
    return jnp.tanh(h2 @ p["mu_w"].T + p["mu_b"])


if __name__ == "__main__":
    key = jax.random.PRNGKey(0)
    kp, kx1, kx2 = jax.random.split(key, 3)
    params = init_params(kp)
    packed = pack_params(params)

    # Tolerance relaxed vs. the pure-f32 version because MXU operands are bf16
    # (f32 accumulation; bias/ReLU/mu/tanh stay f32).
    TOL = 5e-2 if MXU_DTYPE == jnp.bfloat16 else 1e-5

    # Small batch (matches the ONNX-export use case): single exact-fit block.
    state_small = jax.random.normal(kx1, (8, D_IN), jnp.float32)
    out_small = jax.block_until_ready(actor_forward(state_small, packed))
    ref_small = actor_ref(state_small, params)
    assert out_small.shape == (8, 1)
    assert jnp.allclose(out_small, ref_small, atol=TOL, rtol=TOL)

    # Larger batch exercising the streamed batch grid with a ragged last block
    # (grid = 2: blocks of 512 and 488 rows).
    state_big = jax.random.normal(kx2, (1000, D_IN), jnp.float32)
    out_big = jax.block_until_ready(actor_forward(state_big, packed))
    ref_big = actor_ref(state_big, params)
    assert out_big.shape == (1000, 1)
    assert jnp.allclose(out_big, ref_big, atol=TOL, rtol=TOL)

    print("KERNEL_OK")
</pallas_src>

<mosaic_0001>
module attributes {stable_mosaic.version = 11 : i64} {
  func.func @actor_kernel(%arg0: i32, %arg1: memref<8x48xf32, #tpu.memory_space<vmem>>, %arg2: memref<128x256xf32, #tpu.memory_space<vmem>>, %arg3: memref<1x8xf32, #tpu.memory_space<vmem>>) attributes {dimension_semantics = [#tpu.dimension_semantics<parallel>], iteration_bounds = array<i64: 1>, scalar_prefetch = 0 : i64, scratch_operands = 0 : i64, tpu.core_type = #tpu.core_type<tc>, window_params = [{transform_indices = @transform_0, window_bounds = array<i64: 8, 48>}, {pipeline_mode = #tpu.pipeline_mode<synchronous>, transform_indices = @transform_1, window_bounds = array<i64: 128, 256>}, {transform_indices = @transform_2, window_bounds = array<i64: 1, 8>}]} {
    %c0 = arith.constant 0 : index
    %c0_0 = arith.constant 0 : index
    %0 = vector.load %arg1[%c0, %c0_0] : memref<8x48xf32, #tpu.memory_space<vmem>>, vector<8x48xf32>
    %c0_1 = arith.constant 0 : index
    %c0_2 = arith.constant 0 : index
    %1 = vector.load %arg2[%c0_1, %c0_2] : memref<128x256xf32, #tpu.memory_space<vmem>>, vector<128x48xf32>
    %c0_3 = arith.constant 0 : index
    %c48 = arith.constant 48 : index
    %2 = vector.load %arg2[%c0_3, %c48] : memref<128x256xf32, #tpu.memory_space<vmem>>, vector<128x1xf32>
    %c0_4 = arith.constant 0 : index
    %c49 = arith.constant 49 : index
    %3 = vector.load %arg2[%c0_4, %c49] : memref<128x256xf32, #tpu.memory_space<vmem>>, vector<128x1xf32>
    %c0_5 = arith.constant 0 : index
    %c50 = arith.constant 50 : index
    %4 = vector.load %arg2[%c0_5, %c50] : memref<128x256xf32, #tpu.memory_space<vmem>>, vector<128x1xf32>
    %c0_6 = arith.constant 0 : index
    %c51 = arith.constant 51 : index
    %5 = vector.load %arg2[%c0_6, %c51] : memref<128x256xf32, #tpu.memory_space<vmem>>, vector<1x1xf32>
    %c0_7 = arith.constant 0 : index
    %c128 = arith.constant 128 : index
    %6 = vector.load %arg2[%c0_7, %c128] : memref<128x256xf32, #tpu.memory_space<vmem>>, vector<128x128xf32>
    %7 = tpu.transpose %0, [1, 0] : vector<8x48xf32> -> vector<48x8xf32>
    %8 = arith.truncf %1 : vector<128x48xf32> to vector<128x48xbf16>
    %9 = arith.truncf %7 : vector<48x8xf32> to vector<48x8xbf16>
    %cst = arith.constant dense<0.000000e+00> : vector<128x8xf32>
    %10 = tpu.matmul %8, %9, %cst {dimension_numbers = #tpu.dot_dimension_numbers<[1], [0], [0], [1], [0, 0, 1, 1], [], []>} : vector<128x48xbf16>, vector<48x8xbf16>, vector<128x8xf32> -> vector<128x8xf32>
    %11 = vector.broadcast %2 : vector<128x1xf32> to vector<128x8xf32>
    %12 = arith.addf %10, %11 : vector<128x8xf32>
    %cst_8 = arith.constant 0.000000e+00 : f32
    %13 = vector.broadcast %cst_8 : f32 to vector<128x8xf32>
    %14 = arith.maximumf %12, %13 : vector<128x8xf32>
    %15 = arith.truncf %6 : vector<128x128xf32> to vector<128x128xbf16>
    %16 = arith.truncf %14 : vector<128x8xf32> to vector<128x8xbf16>
    %cst_9 = arith.constant dense<0.000000e+00> : vector<128x8xf32>
    %17 = tpu.matmul %15, %16, %cst_9 {dimension_numbers = #tpu.dot_dimension_numbers<[1], [0], [0], [1], [0, 0, 1, 1], [], []>} : vector<128x128xbf16>, vector<128x8xbf16>, vector<128x8xf32> -> vector<128x8xf32>
    %18 = vector.broadcast %3 : vector<128x1xf32> to vector<128x8xf32>
    %19 = arith.addf %17, %18 : vector<128x8xf32>
    %cst_10 = arith.constant 0.000000e+00 : f32
    %20 = vector.broadcast %cst_10 : f32 to vector<128x8xf32>
    %21 = arith.maximumf %19, %20 : vector<128x8xf32>
    %22 = vector.broadcast %4 : vector<128x1xf32> to vector<128x8xf32>
    %23 = arith.mulf %21, %22 : vector<128x8xf32>
    %cst_11 = arith.constant dense<0.000000e+00> : vector<8xf32>
    %24 = vector.multi_reduction <add>, %23, %cst_11 [0] : vector<128x8xf32> to vector<8xf32>
    %25 = vector.shape_cast %24 : vector<8xf32> to vector<1x8xf32>
    %26 = vector.broadcast %5 : vector<1x1xf32> to vector<1x8xf32>
    %27 = arith.addf %25, %26 : vector<1x8xf32>
    %28 = math.tanh %27 : vector<1x8xf32>
    %c0_12 = arith.constant 0 : index
    %c0_13 = arith.constant 0 : index
    %29 = vector.load %arg3[%c0_12, %c0_13] : memref<1x8xf32, #tpu.memory_space<vmem>>, vector<1x8xf32>
    tpu.vector_store %arg3[%c0_12, %c0_13], %28 {strides = array<i32>} : memref<1x8xf32, #tpu.memory_space<vmem>>, vector<1x8xf32>,
    return
  }
  func.func @transform_0(%arg0: i32) -> (i32, i32) {
    %c0_i32 = arith.constant 0 : i32
    %c0_i32_0 = arith.constant 0 : i32
    return %arg0, %c0_i32 : i32, i32
  }
  func.func @transform_1(%arg0: i32) -> (i32, i32) {
    %c0_i32 = arith.constant 0 : i32
    %c0_i32_0 = arith.constant 0 : i32
    %c0_i32_1 = arith.constant 0 : i32
    return %c0_i32, %c0_i32_0 : i32, i32
  }
  func.func @transform_2(%arg0: i32) -> (i32, i32) {
    %c0_i32 = arith.constant 0 : i32
    %c0_i32_0 = arith.constant 0 : i32
    return %c0_i32, %arg0 : i32, i32
  }
}

</mosaic_0001>

<llo_original>
// kernel: actor_forward.1
$region0: #{actor_forward.1}
  #allocation0 [shape = 'u32[]', space=smem, size = 0x4, offset = 0x4, fixed_abs, tag = 'smem constant byte address 0x4 - core index']
  #allocation1 [shape = 'u32[72,128]{1,0:T(1,128)}', space=vmem, size = 0x9000, scoped, tag = 'internal scratch']
  %s0 = inlined_call_operand.hbm [shape: f32[8,48], index: 0, kind: input, shape index: {}]
  %s1 = inlined_call_operand.hbm [shape: f32[128,256], index: 1, kind: input, shape index: {}]
  %s2 = inlined_call_operand.hbm [shape: f32[1,8], index: 2, kind: output, shape index: {}]
  %s3 = sld [smem:[#allocation0]]
  $region26: #{actor_forward.1} parent=0
    _
  %s5 = ssub.s32 1, %s3
  %s6 = scalar_select 0, %s5, %s3
  $region1: #{actor_forward.1} parent=0
    #allocation2 [shape = 'u8[4096]{0}', space=vmem, size = 0x1000, scoped, tag = 'input window, operand 0, single buffered']
    #allocation3 [shape = 's32[1]{0}', space=sflag, size = 0x4, scoped, tag = 'scoped memory for actor_forward.1']
    #allocation4 [shape = 's32[1]{0}', space=sflag, size = 0x4, scoped, tag = 'scoped memory for actor_forward.1']
    #allocation5 [shape = 'u8[131072]{0}', space=vmem, size = 0x20000, scoped, tag = 'input window, operand 1, single buffered']
    #allocation6 [shape = 's32[1]{0}', space=sflag, size = 0x4, scoped, tag = 'scoped memory for actor_forward.1']
    #allocation7 [shape = 'u8[512]{0}', space=vmem, size = 0x400, scoped, tag = 'output window, operand 0, single buffered']
    %7 = vsyncpa [#allocation3], 0
    %8 = vsyncpa [#allocation6], 0
    %9 = vsyncpa [#allocation4], 0
    // Predicated region
    $region2: #{actor_forward.1} parent=1 // pred_check
      _
    $region3: #{actor_forward.1} parent=1 // pred_check_branch
      %11 = sbr.rel (0) target = $region5
    $region4: #{actor_forward.1} parent=1 // pred_region
      %13 = vsyncadd [#allocation3], 0
      %s15 = sshll.u32 %s0, 4
      %s16 = int_to_ptr.hbm [resolvable:$true] %s15
      %s17 = sshll.u32 [#allocation2], 4
      %s18 = int_to_ptr.vmem [resolvable:$true] %s17
      %20 = dma.hbm_to_vmem [thread:$0]  %s16, 128, %s18, [#allocation3]
    $region5: #{actor_forward.1} parent=1 // pred_fallthru
      _
    // Predicated region
    $region6: #{actor_forward.1} parent=1 // pred_check
      _
    $region7: #{actor_forward.1} parent=1 // pred_check_branch
      %22 = sbr.rel (0) target = $region9
    $region8: #{actor_forward.1} parent=1 // pred_region
      %24 = vsyncadd [#allocation6], 0
      %s25 = sshll.u32 %s1, 4
      %s26 = int_to_ptr.hbm [resolvable:$true] %s25
      %s27 = sshll.u32 [#allocation5], 4
      %s28 = int_to_ptr.vmem [resolvable:$true] %s27
      %33 = dma.hbm_to_vmem [thread:$0]  %s26, 4096, %s28, [#allocation6], 256, 256, 16
    $region9: #{actor_forward.1} parent=1 // pred_fallthru
      _
    // Predicated region
    $region10: #{actor_forward.1} parent=1 // pred_check
      _
    $region11: #{actor_forward.1} parent=1 // pred_check_branch
      %35 = sbr.rel (0) target = $region13
    $region12: #{actor_forward.1} parent=1 // pred_region
      %37 = dma.done [#allocation3], 128
    $region13: #{actor_forward.1} parent=1 // pred_fallthru
      _
    // Predicated region
    $region14: #{actor_forward.1} parent=1 // pred_check
      _
    $region15: #{actor_forward.1} parent=1 // pred_check_branch
      %39 = sbr.rel (0) target = $region17
    $region16: #{actor_forward.1} parent=1 // pred_region
      %41 = dma.done [#allocation6], 4096
    $region17: #{actor_forward.1} parent=1 // pred_fallthru
      _
    %v43 = vld [vmem:[#allocation2] sm:$0xff]
    %v44 = vld [vmem:[#allocation5] sm:$0xff]
    %v45 = vld [vmem:[#allocation5 + $0x10] sm:$0xff]
    %v46 = vld [vmem:[#allocation5 + $0x20] sm:$0xff]
    %v47 = vld [vmem:[#allocation5 + $0x30] sm:$0xff]
    %v48 = vld [vmem:[#allocation5 + $0x40] sm:$0xff]
    %v49 = vld [vmem:[#allocation5 + $0x50] sm:$0xff]
    %v50 = vld [vmem:[#allocation5 + $0x60] sm:$0xff]
    %v51 = vld [vmem:[#allocation5 + $0x70] sm:$0xff]
    %v52 = vld [vmem:[#allocation5 + $0x80] sm:$0xff]
    %v53 = vld [vmem:[#allocation5 + $0x90] sm:$0xff]
    %v54 = vld [vmem:[#allocation5 + $0xa0] sm:$0xff]
    %v55 = vld [vmem:[#allocation5 + $0xb0] sm:$0xff]
    %v56 = vld [vmem:[#allocation5 + $0xc0] sm:$0xff]
    %v57 = vld [vmem:[#allocation5 + $0xd0] sm:$0xff]
    %v58 = vld [vmem:[#allocation5 + $0xe0] sm:$0xff]
    %v59 = vld [vmem:[#allocation5 + $0xf0] sm:$0xff]
    %v60 = vld [vmem:[#allocation5] ss:$0 sm:$0xff]
    %v61 = vld [vmem:[#allocation5 + $0x8] sm:$0xff]
    %v62 = vld [vmem:[#allocation5 + $0x18] sm:$0xff]
    %v63 = vld [vmem:[#allocation5 + $0x28] sm:$0xff]
    %v64 = vld [vmem:[#allocation5 + $0x38] sm:$0xff]
    %v65 = vld [vmem:[#allocation5 + $0x48] sm:$0xff]
    %v66 = vld [vmem:[#allocation5 + $0x58] sm:$0xff]
    %v67 = vld [vmem:[#allocation5 + $0x68] sm:$0xff]
    %v68 = vld [vmem:[#allocation5 + $0x78] sm:$0xff]
    %v69 = vld [vmem:[#allocation5 + $0x88] sm:$0xff]
    %v70 = vld [vmem:[#allocation5 + $0x98] sm:$0xff]
    %v71 = vld [vmem:[#allocation5 + $0xa8] sm:$0xff]
    %v72 = vld [vmem:[#allocation5 + $0xb8] sm:$0xff]
    %v73 = vld [vmem:[#allocation5 + $0xc8] sm:$0xff]
    %v74 = vld [vmem:[#allocation5 + $0xd8] sm:$0xff]
    %v75 = vld [vmem:[#allocation5 + $0xe8] sm:$0xff]
    %v76 = vld [vmem:[#allocation5 + $0xf8] sm:$0xff]
    %77 = vxpose.xlu0.b32.start [1/16] %v43, 128
    %78 = vxpose.xlu0.b32.cont [2/16] 0.0, 128
    %79 = vxpose.xlu0.b32.cont [3/16] 0.0, 128
    %80 = vxpose.xlu0.b32.cont [4/16] 0.0, 128
    %81 = vxpose.xlu0.b32.cont [5/16] 0.0, 128
    %82 = vxpose.xlu0.b32.cont [6/16] 0.0, 128
    %83 = vxpose.xlu0.b32.cont [7/16] 0.0, 128
    %84 = vxpose.xlu0.b32.cont [8/16] 0.0, 128
    %85 = vxpose.xlu0.b32.cont [9/16] 0.0, 128
    %86 = vxpose.xlu0.b32.cont [10/16] 0.0, 128
    %87 = vxpose.xlu0.b32.cont [11/16] 0.0, 128
    %88 = vxpose.xlu0.b32.cont [12/16] 0.0, 128
    %89 = vxpose.xlu0.b32.cont [13/16] 0.0, 128
    %90 = vxpose.xlu0.b32.cont [14/16] 0.0, 128
    %91 = vxpose.xlu0.b32.cont [15/16] 0.0, 128
    %92 = vxpose.xlu0.b32.end [16/16] 0.0, 128
    %v93 = vpop.trf.xlu0
    %v94 = vpop.trf.xlu0
    %v95 = vpop.trf.xlu0
    %v96 = vpop.trf.xlu0
    %v97 = vpop.trf.xlu0
    %v98 = vpop.trf.xlu0
    %v99 = vpop.trf.xlu0
    %v100 = vpop.trf.xlu0
    %v101 = vpop.trf.xlu0
    %v102 = vpop.trf.xlu0
    %v103 = vpop.trf.xlu0
    %v104 = vpop.trf.xlu0
    %v105 = vpop.trf.xlu0
    %v106 = vpop.trf.xlu0
    %v107 = vpop.trf.xlu0
    %v108 = vpop.trf.xlu0
    %v109 = vpack.c.bf16 %v45, %v44
    %v110 = vpack.c.bf16 %v47, %v46
    %v111 = vpack.c.bf16 %v49, %v48
    %v112 = vpack.c.bf16 %v51, %v50
    %v113 = vpack.c.bf16 %v53, %v52
    %v114 = vpack.c.bf16 %v55, %v54
    %v115 = vpack.c.bf16 %v57, %v56
    %v116 = vpack.c.bf16 %v59, %v58
    %v117 = vpack.c.bf16 %v94, %v93
    %v118 = vpack.c.bf16 %v96, %v95
    %v119 = vpack.c.bf16 %v98, %v97
    %121 = vset.pattern.permute.xlu0 48
    %122 = vperm.xlu0 %121, %v44
    %v123 = vpop.permute.xlu0 %122
    %126 = vset.pattern.permute.xlu0 48
    %127 = vperm.xlu0 %126, %v45
    %v128 = vpop.permute.xlu0 %127
    %131 = vset.pattern.permute.xlu0 48
    %132 = vperm.xlu0 %131, %v46
    %v133 = vpop.permute.xlu0 %132
    %136 = vset.pattern.permute.xlu0 48
    %137 = vperm.xlu0 %136, %v47
    %v138 = vpop.permute.xlu0 %137
    %141 = vset.pattern.permute.xlu0 48
    %142 = vperm.xlu0 %141, %v48
    %v143 = vpop.permute.xlu0 %142
    %146 = vset.pattern.permute.xlu0 48
    %147 = vperm.xlu0 %146, %v49
    %v148 = vpop.permute.xlu0 %147
    %151 = vset.pattern.permute.xlu0 48
    %152 = vperm.xlu0 %151, %v50
    %v153 = vpop.permute.xlu0 %152
    %156 = vset.pattern.permute.xlu0 48
    %157 = vperm.xlu0 %156, %v51
    %v158 = vpop.permute.xlu0 %157
    %161 = vset.pattern.permute.xlu0 48
    %162 = vperm.xlu0 %161, %v52
    %v163 = vpop.permute.xlu0 %162
    %166 = vset.pattern.permute.xlu0 48
    %167 = vperm.xlu0 %166, %v53
    %v168 = vpop.permute.xlu0 %167
    %171 = vset.pattern.permute.xlu0 48
    %172 = vperm.xlu0 %171, %v54
    %v173 = vpop.permute.xlu0 %172
    %176 = vset.pattern.permute.xlu0 48
    %177 = vperm.xlu0 %176, %v55
    %v178 = vpop.permute.xlu0 %177
    %181 = vset.pattern.permute.xlu0 48
    %182 = vperm.xlu0 %181, %v56
    %v183 = vpop.permute.xlu0 %182
    %186 = vset.pattern.permute.xlu0 48
    %187 = vperm.xlu0 %186, %v57
    %v188 = vpop.permute.xlu0 %187
    %191 = vset.pattern.permute.xlu0 48
    %192 = vperm.xlu0 %191, %v58
    %v193 = vpop.permute.xlu0 %192
    %196 = vset.pattern.permute.xlu0 48
    %197 = vperm.xlu0 %196, %v59
    %v198 = vpop.permute.xlu0 %197
    %vm200 = vcmask 392192
    %v202 = vsel %vm200, %v109, 0
    %v205 = vsel %vm200, %v110, 0
    %v208 = vsel %vm200, %v111, 0
    %v211 = vsel %vm200, %v112, 0
    %v214 = vsel %vm200, %v113, 0
    %v217 = vsel %vm200, %v114, 0
    %v220 = vsel %vm200, %v115, 0
    %v223 = vsel %vm200, %v116, 0
    %225 = vmatpush.bf16.msra.mxu0 0
    %226 = vmatpush.bf16.msra.mxu0 0
    %227 = vmatpush.bf16.msra.mxu0 0
    %228 = vmatpush.bf16.msra.mxu0 0
    %229 = vmatpush.bf16.msra.mxu0 0
    %230 = vmatpush.bf16.msra.mxu0 %v119
    %231 = vmatpush.bf16.msra.mxu0 %v118
    %232 = vmatpush.bf16.msra.mxu0 %v117
    %233 = vmatmul.bf16.gmra.mxu0 %v202
    %v234 = vpop.f32.mrf.mxu0
    %v235 = vadd.f32 %v123, %v234
    %v236 = vpop.f32.mrf.mxu0
    %v237 = vadd.f32 %v128, %v236
    %238 = vmatmul.bf16.gmra.mxu0 %v205
    %v239 = vpop.f32.mrf.mxu0
    %v240 = vadd.f32 %v133, %v239
    %v241 = vpop.f32.mrf.mxu0
    %v242 = vadd.f32 %v138, %v241
    %243 = vmatmul.bf16.gmra.mxu0 %v208
    %v244 = vpop.f32.mrf.mxu0
    %v245 = vadd.f32 %v143, %v244
    %v246 = vpop.f32.mrf.mxu0
    %v247 = vadd.f32 %v148, %v246
    %248 = vmatmul.bf16.gmra.mxu0 %v211
    %v249 = vpop.f32.mrf.mxu0
    %v250 = vadd.f32 %v153, %v249
    %v251 = vpop.f32.mrf.mxu0
    %v252 = vadd.f32 %v158, %v251
    %253 = vmatmul.bf16.gmra.mxu0 %v214
    %v254 = vpop.f32.mrf.mxu0
    %v255 = vadd.f32 %v163, %v254
    %v256 = vpop.f32.mrf.mxu0
    %v257 = vadd.f32 %v168, %v256
    %258 = vmatmul.bf16.gmra.mxu0 %v217
    %v259 = vpop.f32.mrf.mxu0
    %v260 = vadd.f32 %v173, %v259
    %v261 = vpop.f32.mrf.mxu0
    %v262 = vadd.f32 %v178, %v261
    %263 = vmatmul.bf16.gmra.mxu0 %v220
    %v264 = vpop.f32.mrf.mxu0
    %v265 = vadd.f32 %v183, %v264
    %v266 = vpop.f32.mrf.mxu0
    %v267 = vadd.f32 %v188, %v266
    %268 = vmatmul.bf16.gmra.mxu0 %v223
    %v269 = vpop.f32.mrf.mxu0
    %v270 = vadd.f32 %v193, %v269
    %v271 = vpop.f32.mrf.mxu0
    %v272 = vadd.f32 %v198, %v271
    %273 = vdwg.mxu0
    %v274 = vmax.f32 %v235, 0.0
    %v275 = vmax.f32 %v237, 0.0
    %v276 = vmax.f32 %v240, 0.0
    %v277 = vmax.f32 %v242, 0.0
    %v278 = vmax.f32 %v245, 0.0
    %v279 = vmax.f32 %v247, 0.0
    %v280 = vmax.f32 %v250, 0.0
    %v281 = vmax.f32 %v252, 0.0
    %v282 = vmax.f32 %v255, 0.0
    %v283 = vmax.f32 %v257, 0.0
    %v284 = vmax.f32 %v260, 0.0
    %v285 = vmax.f32 %v262, 0.0
    %v286 = vmax.f32 %v265, 0.0
    %v287 = vmax.f32 %v267, 0.0
    %v288 = vmax.f32 %v270, 0.0
    %v289 = vmax.f32 %v272, 0.0
    %v290 = vpack.c.bf16 %v62, %v61
    %v291 = vpack.c.bf16 %v64, %v63
    %v292 = vpack.c.bf16 %v66, %v65
    %v293 = vpack.c.bf16 %v68, %v67
    %v294 = vpack.c.bf16 %v70, %v69
    %v295 = vpack.c.bf16 %v72, %v71
    %v296 = vpack.c.bf16 %v74, %v73
    %v297 = vpack.c.bf16 %v76, %v75
    %v298 = vpack.c.bf16 %v275, %v274
    %v299 = vpack.c.bf16 %v277, %v276
    %v300 = vpack.c.bf16 %v279, %v278
    %v301 = vpack.c.bf16 %v281, %v280
    %v302 = vpack.c.bf16 %v283, %v282
    %v303 = vpack.c.bf16 %v285, %v284
    %v304 = vpack.c.bf16 %v287, %v286
    %v305 = vpack.c.bf16 %v289, %v288
    %306 = vset.pattern.permute.xlu0 49
    %307 = vperm.xlu0 %306, %v44
    %v308 = vpop.permute.xlu0 %307
    %310 = vset.pattern.permute.xlu0 49
    %311 = vperm.xlu0 %310, %v45
    %v312 = vpop.permute.xlu0 %311
    %314 = vset.pattern.permute.xlu0 49
    %315 = vperm.xlu0 %314, %v46
    %v316 = vpop.permute.xlu0 %315
    %318 = vset.pattern.permute.xlu0 49
    %319 = vperm.xlu0 %318, %v47
    %v320 = vpop.permute.xlu0 %319
    %322 = vset.pattern.permute.xlu0 49
    %323 = vperm.xlu0 %322, %v48
    %v324 = vpop.permute.xlu0 %323
    %326 = vset.pattern.permute.xlu0 49
    %327 = vperm.xlu0 %326, %v49
    %v328 = vpop.permute.xlu0 %327
    %330 = vset.pattern.permute.xlu0 49
    %331 = vperm.xlu0 %330, %v50
    %v332 = vpop.permute.xlu0 %331
    %334 = vset.pattern.permute.xlu0 49
    %335 = vperm.xlu0 %334, %v51
    %v336 = vpop.permute.xlu0 %335
    %338 = vset.pattern.permute.xlu0 49
    %339 = vperm.xlu0 %338, %v52
    %v340 = vpop.permute.xlu0 %339
    %342 = vset.pattern.permute.xlu0 49
    %343 = vperm.xlu0 %342, %v53
    %v344 = vpop.permute.xlu0 %343
    %346 = vset.pattern.permute.xlu0 49
    %347 = vperm.xlu0 %346, %v54
    %v348 = vpop.permute.xlu0 %347
    %350 = vset.pattern.permute.xlu0 49
    %351 = vperm.xlu0 %350, %v55
    %v352 = vpop.permute.xlu0 %351
    %354 = vset.pattern.permute.xlu0 49
    %355 = vperm.xlu0 %354, %v56
    %v356 = vpop.permute.xlu0 %355
    %358 = vset.pattern.permute.xlu0 49
    %359 = vperm.xlu0 %358, %v57
    %v360 = vpop.permute.xlu0 %359
    %362 = vset.pattern.permute.xlu0 49
    %363 = vperm.xlu0 %362, %v58
    %v364 = vpop.permute.xlu0 %363
    %366 = vset.pattern.permute.xlu0 49
    %367 = vperm.xlu0 %366, %v59
    %v368 = vpop.permute.xlu0 %367
    %370 = vmatpush.bf16.msra.mxu0 %v305
    %371 = vmatpush.bf16.msra.mxu0 %v304
    %372 = vmatpush.bf16.msra.mxu0 %v303
    %373 = vmatpush.bf16.msra.mxu0 %v302
    %374 = vmatpush.bf16.msra.mxu0 %v301
    %375 = vmatpush.bf16.msra.mxu0 %v300
    %376 = vmatpush.bf16.msra.mxu0 %v299
    %377 = vmatpush.bf16.msra.mxu0 %v298
    %378 = vmatmul.bf16.gmra.mxu0 %v290
    %v379 = vpop.f32.mrf.mxu0
    %v380 = vadd.f32 %v308, %v379
    %v381 = vpop.f32.mrf.mxu0
    %v382 = vadd.f32 %v312, %v381
    %383 = vmatmul.bf16.gmra.mxu0 %v291
    %v384 = vpop.f32.mrf.mxu0
    %v385 = vadd.f32 %v316, %v384
    %v386 = vpop.f32.mrf.mxu0
    %v387 = vadd.f32 %v320, %v386
    %388 = vmatmul.bf16.gmra.mxu0 %v292
    %v389 = vpop.f32.mrf.mxu0
    %v390 = vadd.f32 %v324, %v389
    %v391 = vpop.f32.mrf.mxu0
    %v392 = vadd.f32 %v328, %v391
    %393 = vmatmul.bf16.gmra.mxu0 %v293
    %v394 = vpop.f32.mrf.mxu0
    %v395 = vadd.f32 %v332, %v394
    %v396 = vpop.f32.mrf.mxu0
    %v397 = vadd.f32 %v336, %v396
    %398 = vmatmul.bf16.gmra.mxu0 %v294
    %v399 = vpop.f32.mrf.mxu0
    %v400 = vadd.f32 %v340, %v399
    %v401 = vpop.f32.mrf.mxu0
    %v402 = vadd.f32 %v344, %v401
    %403 = vmatmul.bf16.gmra.mxu0 %v295
    %v404 = vpop.f32.mrf.mxu0
    %v405 = vadd.f32 %v348, %v404
    %v406 = vpop.f32.mrf.mxu0
    %v407 = vadd.f32 %v352, %v406
    %408 = vmatmul.bf16.gmra.mxu0 %v296
    %v409 = vpop.f32.mrf.mxu0
    %v410 = vadd.f32 %v356, %v409
    %v411 = vpop.f32.mrf.mxu0
    %v412 = vadd.f32 %v360, %v411
    %413 = vmatmul.bf16.gmra.mxu0 %v297
    %v414 = vpop.f32.mrf.mxu0
    %v415 = vadd.f32 %v364, %v414
    %v416 = vpop.f32.mrf.mxu0
    %v417 = vadd.f32 %v368, %v416
    %418 = vdwg.mxu0
    %v419 = vmax.f32 %v380, 0.0
    %v420 = vmax.f32 %v382, 0.0
    %v421 = vmax.f32 %v385, 0.0
    %v422 = vmax.f32 %v387, 0.0
    %v423 = vmax.f32 %v390, 0.0
    %v424 = vmax.f32 %v392, 0.0
    %v425 = vmax.f32 %v395, 0.0
    %v426 = vmax.f32 %v397, 0.0
    %v427 = vmax.f32 %v400, 0.0
    %v428 = vmax.f32 %v402, 0.0
    %v429 = vmax.f32 %v405, 0.0
    %v430 = vmax.f32 %v407, 0.0
    %v431 = vmax.f32 %v410, 0.0
    %v432 = vmax.f32 %v412, 0.0
    %v433 = vmax.f32 %v415, 0.0
    %v434 = vmax.f32 %v417, 0.0
    %435 = vset.pattern.permute.xlu0 50
    %436 = vperm.xlu0 %435, %v44
    %v437 = vpop.permute.xlu0 %436
    %439 = vset.pattern.permute.xlu0 50
    %440 = vperm.xlu0 %439, %v45
    %v441 = vpop.permute.xlu0 %440
    %443 = vset.pattern.permute.xlu0 50
    %444 = vperm.xlu0 %443, %v46
    %v445 = vpop.permute.xlu0 %444
    %447 = vset.pattern.permute.xlu0 50
    %448 = vperm.xlu0 %447, %v47
    %v449 = vpop.permute.xlu0 %448
    %451 = vset.pattern.permute.xlu0 50
    %452 = vperm.xlu0 %451, %v48
    %v453 = vpop.permute.xlu0 %452
    %455 = vset.pattern.permute.xlu0 50
    %456 = vperm.xlu0 %455, %v49
    %v457 = vpop.permute.xlu0 %456
    %459 = vset.pattern.permute.xlu0 50
    %460 = vperm.xlu0 %459, %v50
    %v461 = vpop.permute.xlu0 %460
    %463 = vset.pattern.permute.xlu0 50
    %464 = vperm.xlu0 %463, %v51
    %v465 = vpop.permute.xlu0 %464
    %467 = vset.pattern.permute.xlu0 50
    %468 = vperm.xlu0 %467, %v52
    %v469 = vpop.permute.xlu0 %468
    %471 = vset.pattern.permute.xlu0 50
    %472 = vperm.xlu0 %471, %v53
    %v473 = vpop.permute.xlu0 %472
    %475 = vset.pattern.permute.xlu0 50
    %476 = vperm.xlu0 %475, %v54
    %v477 = vpop.permute.xlu0 %476
    %479 = vset.pattern.permute.xlu0 50
    %480 = vperm.xlu0 %479, %v55
    %v481 = vpop.permute.xlu0 %480
    %483 = vset.pattern.permute.xlu0 50
    %484 = vperm.xlu0 %483, %v56
    %v485 = vpop.permute.xlu0 %484
    %487 = vset.pattern.permute.xlu0 50
    %488 = vperm.xlu0 %487, %v57
    %v489 = vpop.permute.xlu0 %488
    %491 = vset.pattern.permute.xlu0 50
    %492 = vperm.xlu0 %491, %v58
    %v493 = vpop.permute.xlu0 %492
    %495 = vset.pattern.permute.xlu0 50
    %496 = vperm.xlu0 %495, %v59
    %v497 = vpop.permute.xlu0 %496
    %v499 = vmul.f32 %v419, %v437
    %v500 = vmul.f32 %v420, %v441
    %v501 = vmul.f32 %v421, %v445
    %v502 = vmul.f32 %v422, %v449
    %v503 = vmul.f32 %v423, %v453
    %v504 = vmul.f32 %v424, %v457
    %v505 = vmul.f32 %v425, %v461
    %v506 = vmul.f32 %v426, %v465
    %v507 = vmul.f32 %v427, %v469
    %v508 = vmul.f32 %v428, %v473
    %v509 = vmul.f32 %v429, %v477
    %v510 = vmul.f32 %v430, %v481
    %v511 = vmul.f32 %v431, %v485
    %v512 = vmul.f32 %v432, %v489
    %v513 = vmul.f32 %v433, %v493
    %v514 = vmul.f32 %v434, %v497
    %vm515 = vcmask 64512
    %v516 = vsel %vm515, %v499, 0.0
    %v517 = vsel %vm515, %v500, 0.0
    %v518 = vadd.f32 %v516, %v517
    %v519 = vsel %vm515, %v501, 0.0
    %v520 = vadd.f32 %v518, %v519
    %v521 = vsel %vm515, %v502, 0.0
    %v522 = vadd.f32 %v520, %v521
    %v523 = vsel %vm515, %v503, 0.0
    %v524 = vadd.f32 %v522, %v523
    %v525 = vsel %vm515, %v504, 0.0
    %v526 = vadd.f32 %v524, %v525
    %v527 = vsel %vm515, %v505, 0.0
    %v528 = vadd.f32 %v526, %v527
    %v529 = vsel %vm515, %v506, 0.0
    %v530 = vadd.f32 %v528, %v529
    %v531 = vsel %vm515, %v507, 0.0
    %v532 = vadd.f32 %v530, %v531
    %v533 = vsel %vm515, %v508, 0.0
    %v534 = vadd.f32 %v532, %v533
    %v535 = vsel %vm515, %v509, 0.0
    %v536 = vadd.f32 %v534, %v535
    %v537 = vsel %vm515, %v510, 0.0
    %v538 = vadd.f32 %v536, %v537
    %v539 = vsel %vm515, %v511, 0.0
    %v540 = vadd.f32 %v538, %v539
    %v541 = vsel %vm515, %v512, 0.0
    %v542 = vadd.f32 %v540, %v541
    %v543 = vsel %vm515, %v513, 0.0
    %v544 = vadd.f32 %v542, %v543
    %v545 = vsel %vm515, %v514, 0.0
    %v546 = vadd.f32 %v544, %v545
    %v547 = vrot.slane %v546, 4
    %v548 = vadd.f32 %v546, %v547
    %v549 = vrot.slane %v548, 2
    %v550 = vadd.f32 %v548, %v549
    %v551 = vrot.slane %v550, 1
    %v552 = vadd.f32 %v550, %v551
    %554 = vset.pattern.permute.xlu0 51
    %555 = vperm.xlu0 %554, %v60
    %v556 = vpop.permute.xlu0 %555
    %v558 = vadd.f32 %v552, %v556
    %v559 = vtanh.pop %v558
    %vm560 = vcmask 57344
    %561 = vst.msk [vmem:[#allocation7] sm:$0x1] %vm560, %v559
    // Predicated region
    $region18: #{actor_forward.1} parent=1 // pred_check
      _
    $region19: #{actor_forward.1} parent=1 // pred_check_branch
      %563 = sbr.rel (0) target = $region21
    $region20: #{actor_forward.1} parent=1 // pred_region
      %565 = vsyncadd [#allocation4], 0
      %s567 = sshll.u32 [#allocation7], 4
      %s568 = int_to_ptr.vmem [resolvable:$true] %s567
      %s569 = sshll.u32 %s2, 4
      %s570 = int_to_ptr.hbm [resolvable:$true] %s569
      %572 = dma.vmem_to_hbm [thread:$0]  %s568, 16, %s570, [#allocation4]
    $region21: #{actor_forward.1} parent=1 // pred_fallthru
      _
    // Predicated region
    $region22: #{actor_forward.1} parent=1 // pred_check
      _
    $region23: #{actor_forward.1} parent=1 // pred_check_branch
      %574 = sbr.rel (0) target = $region25
    $region24: #{actor_forward.1} parent=1 // pred_region
      %576 = dma.done [#allocation4], 16
    $region25: #{actor_forward.1} parent=1 // pred_fallthru
      _
    %577 = vsyncpa [#allocation3], 1
    %578 = vsyncpa [#allocation6], 1
    %579 = vsyncpa [#allocation4], 1

</llo_original>
